<compile_context>
chip_gen: v5e
topology: v5e:2x2
jax: 0.10.0
libtpu: 0.0.40
codegen_flags: <defaults>
</compile_context>

<pallas_src>
import functools

import jax
import jax.numpy as jnp
from jax.experimental import pallas as pl
from jax.experimental.pallas import tpu as pltpu


_LANE = 128      # lane width: weight/output feature dims padded to this
_SUBLANE = 8     # sublane width: row tiles kept multiples of this


def _round_up(x: int, m: int) -> int:
    return (x + m - 1) // m * m


def _fused_mlp_kernel(x_ref, *refs, num_layers: int, compute_dtype):
    """Whole MLP for one M-tile; every intermediate stays in VMEM/vregs.

    refs = (w0, b0, w1, b1, ..., w_{L-1}, b_{L-1}, o_ref)
      w_l : (K_l, N_l)  transposed (in, out) weights, zero-padded, compute_dtype
      b_l : (1,   N_l)  zero-padded bias, compute_dtype
      o_ref : (tm, N_{L-1})  lane-padded output tile
    """
    o_ref = refs[-1]
    h = x_ref[...].astype(compute_dtype)            # no-op in the f32 path
    for l in range(num_layers):
        w = refs[2 * l][...]                        # already compute_dtype
        b = refs[2 * l + 1][...]
        y = jnp.dot(h, w, preferred_element_type=jnp.float32)   # MXU, f32 acc
        y = y + b.astype(jnp.float32)               # f32 epilogue on the VPU
        if l < num_layers - 1:
            # ReLU fused with the downcast feeding the next matmul.
            h = jnp.maximum(y, 0.0).astype(compute_dtype)
        else:
            o_ref[...] = y.astype(o_ref.dtype)      # only the last layer hits HBM


def _vmem_ceiling_bytes() -> int:
    """~75% of the chip's VMEM; conservative v7x fallback if the query fails."""
    try:
        cap = int(pltpu.get_tpu_info().vmem_capacity_bytes)
    except Exception:
        cap = 64 * 1024 * 1024
    return cap * 3 // 4


class DAMLPPallas:
    """JAX/Pallas port of DA_MLP: num_layers Linear layers, ReLU on all but last."""

    def __init__(self, input_dim, hidden_dim, output_dim, num_layers, key,
                 *, tile_m=512, use_bf16=False):
        self.num_layers = num_layers
        self.input_dim = input_dim
        self.output_dim = output_dim
        self.tile_m = max(_SUBLANE, _round_up(tile_m, _SUBLANE))
        self.compute_dtype = jnp.bfloat16 if use_bf16 else jnp.float32

        h = [hidden_dim] * (num_layers - 1)
        dims_in = [input_dim] + h
        dims_out = h + [output_dim]

        self.params = []   # PyTorch-layout (out, in) f32 weights, for reference
        self.padded = []   # (W^T padded, bias padded) in compute_dtype, built once
        for li, (n, k) in enumerate(zip(dims_in, dims_out)):
            key, wk, bk = jax.random.split(key, 3)
            bound = 1.0 / (n ** 0.5)   # mimics nn.Linear uniform(-1/sqrt(n), 1/sqrt(n))
            w = jax.random.uniform(wk, (k, n), jnp.float32, -bound, bound)
            b = jax.random.uniform(bk, (k,), jnp.float32, -bound, bound)
            self.params.append((w, b))

            # Layer 0 keeps the real contraction dim so x never needs feature
            # padding; hidden contraction dims are 128-padded (matching the
            # zero-padded activations produced inside the kernel).
            k_pad = n if li == 0 else _round_up(n, _LANE)
            n_pad = _round_up(k, _LANE)
            wt = jnp.zeros((k_pad, n_pad), jnp.float32).at[:n, :k].set(w.T)
            bp = jnp.zeros((1, n_pad), jnp.float32).at[0, :k].set(b)
            self.padded.append((wt.astype(self.compute_dtype),
                                bp.astype(self.compute_dtype)))

        self.np_last = _round_up(output_dim, _LANE)
        self.max_np = max(w.shape[1] for w, _ in self.padded)

    def _forward_2d(self, x2d):
        M, K0 = x2d.shape
        assert K0 == self.input_dim

        # Single tile when M fits; otherwise 256-multiple tiles and a cdiv
        # grid (Pallas masks the ragged tail tile — no host-side row pad).
        tm = M if M <= self.tile_m else self.tile_m
        grid_m = pl.cdiv(M, tm)

        in_specs = [pl.BlockSpec((tm, K0), lambda i: (i, 0))]
        operands = [x2d]
        for wt, bp in self.padded:
            # Constant index_map + single buffer: fetched once, VMEM-resident.
            in_specs.append(pl.BlockSpec(wt.shape, lambda i: (0, 0),
                                         pipeline_mode=pl.Buffered(1)))
            in_specs.append(pl.BlockSpec(bp.shape, lambda i: (0, 0),
                                         pipeline_mode=pl.Buffered(1)))
            operands.extend([wt, bp])
        out_spec = pl.BlockSpec((tm, self.np_last), lambda i: (i, 0))

        x_bytes = jnp.dtype(x2d.dtype).itemsize
        out_bytes = x_bytes
        param_bytes = sum(w.size * w.dtype.itemsize + b.size * b.dtype.itemsize
                          for w, b in self.padded)
        act_bytes = 2 * tm * self.max_np * 4          # live f32 y / h per tile
        vmem_est = (2 * tm * K0 * x_bytes              # double-buffered x tiles
                    + 2 * tm * self.np_last * out_bytes  # double-buffered out tiles
                    + param_bytes                      # Buffered(1) params
                    + act_bytes)
        vmem_limit = int(min(max(int(vmem_est * 1.3), 16 * 1024 * 1024),
                             _vmem_ceiling_bytes()))

        # Logical (unpadded) FLOPs, actual stored byte counts (advisory only).
        flops = 2 * M * sum(w.shape[0] * w.shape[1] for w, _ in self.params)
        bytes_accessed = (x2d.size * x_bytes + M * self.np_last * out_bytes
                          + param_bytes)

        kernel = functools.partial(_fused_mlp_kernel,
                                   num_layers=self.num_layers,
                                   compute_dtype=self.compute_dtype)

        out_pad = pl.pallas_call(
            kernel,
            out_shape=jax.ShapeDtypeStruct((M, self.np_last), x2d.dtype),
            grid=(grid_m,),
            in_specs=in_specs,
            out_specs=out_spec,
            compiler_params=pltpu.CompilerParams(
                dimension_semantics=("parallel",),   # shards M-tiles on v7x's 2 TCs
                vmem_limit_bytes=vmem_limit),
            cost_estimate=pl.CostEstimate(flops=flops, transcendentals=0,
                                          bytes_accessed=bytes_accessed),
        )(*operands)

        if self.np_last != self.output_dim:
            # Lane-dense stores inside the kernel; trim the zero lane padding
            # here (fold into the consumer when fusing into a larger graph).
            out_pad = out_pad[:, :self.output_dim]
        return out_pad

    def __call__(self, x):
        lead_shape = x.shape[:-1]
        x2d = x.reshape(-1, x.shape[-1])
        y2d = self._forward_2d(x2d)
        return y2d.reshape(*lead_shape, self.output_dim)


def _reference_forward(params, x, num_layers):
    x2d = x.reshape(-1, x.shape[-1]).astype(jnp.float32)
    for i, (w, b) in enumerate(params):
        x2d = jnp.matmul(x2d, w.T, precision=jax.lax.Precision.HIGHEST) + b
        if i < num_layers - 1:
            x2d = jnp.maximum(x2d, 0.0)
    return x2d.reshape(*x.shape[:-1], -1)


if __name__ == "__main__":
    key = jax.random.PRNGKey(0)
    k_in, k_rag, k_params = jax.random.split(key, 3)

    batch, seq = 2, 8
    input_dim, hidden_dim, output_dim, num_layers = 16, 32, 8, 3

    x = jax.random.normal(k_in, (batch, seq, input_dim), jnp.float32)

    # f32-operand path.
    mlp = DAMLPPallas(input_dim, hidden_dim, output_dim, num_layers, k_params)
    out = jax.block_until_ready(mlp(x))
    ref = _reference_forward(mlp.params, x, num_layers)
    assert out.shape == (batch, seq, output_dim), out.shape
    assert jnp.allclose(out, ref, atol=5e-3, rtol=5e-3), "f32 mismatch vs reference"

    # bf16-operand / f32-accumulate path (fast path on v5e/v6e/v7x).
    mlp_bf16 = DAMLPPallas(input_dim, hidden_dim, output_dim, num_layers,
                           k_params, use_bf16=True)
    out_bf16 = jax.block_until_ready(mlp_bf16(x))
    assert out_bf16.shape == (batch, seq, output_dim), out_bf16.shape
    assert jnp.allclose(out_bf16, ref, atol=1e-1, rtol=1e-1), "bf16 mismatch vs reference"

    # Ragged-M path: M=21 rows with 8-row tiles -> grid=3, masked tail tile
    # (exercises the no-host-pad handling of the last partial M-tile).
    x_rag = jax.random.normal(k_rag, (3, 7, input_dim), jnp.float32)
    mlp_rag = DAMLPPallas(input_dim, hidden_dim, output_dim, num_layers,
                          k_params, tile_m=8)
    out_rag = jax.block_until_ready(mlp_rag(x_rag))
    ref_rag = _reference_forward(mlp_rag.params, x_rag, num_layers)
    assert out_rag.shape == (3, 7, output_dim), out_rag.shape
    assert jnp.allclose(out_rag, ref_rag, atol=5e-3, rtol=5e-3), "ragged-M mismatch"

    print("KERNEL_OK")
</pallas_src>

<mosaic_0001>
module attributes {stable_mosaic.version = 11 : i64} {
  func.func @_fused_mlp_kernel(%arg0: i32, %arg1: memref<16x16xf32, #tpu.memory_space<vmem>>, %arg2: memref<16x128xf32, #tpu.memory_space<vmem>>, %arg3: memref<1x128xf32, #tpu.memory_space<vmem>>, %arg4: memref<128x128xf32, #tpu.memory_space<vmem>>, %arg5: memref<1x128xf32, #tpu.memory_space<vmem>>, %arg6: memref<128x128xf32, #tpu.memory_space<vmem>>, %arg7: memref<1x128xf32, #tpu.memory_space<vmem>>, %arg8: memref<16x128xf32, #tpu.memory_space<vmem>>) attributes {dimension_semantics = [#tpu.dimension_semantics<parallel>], iteration_bounds = array<i64: 1>, scalar_prefetch = 0 : i64, scratch_operands = 0 : i64, tpu.core_type = #tpu.core_type<tc>, window_params = [{transform_indices = @transform_0, window_bounds = array<i64: 16, 16>}, {pipeline_mode = #tpu.pipeline_mode<synchronous>, transform_indices = @transform_1, window_bounds = array<i64: 16, 128>}, {pipeline_mode = #tpu.pipeline_mode<synchronous>, transform_indices = @transform_2, window_bounds = array<i64: 1, 128>}, {pipeline_mode = #tpu.pipeline_mode<synchronous>, transform_indices = @transform_3, window_bounds = array<i64: 128, 128>}, {pipeline_mode = #tpu.pipeline_mode<synchronous>, transform_indices = @transform_4, window_bounds = array<i64: 1, 128>}, {pipeline_mode = #tpu.pipeline_mode<synchronous>, transform_indices = @transform_5, window_bounds = array<i64: 128, 128>}, {pipeline_mode = #tpu.pipeline_mode<synchronous>, transform_indices = @transform_6, window_bounds = array<i64: 1, 128>}, {transform_indices = @transform_7, window_bounds = array<i64: 16, 128>}]} {
    %c0 = arith.constant 0 : index
    %c0_0 = arith.constant 0 : index
    %0 = vector.load %arg1[%c0, %c0_0] : memref<16x16xf32, #tpu.memory_space<vmem>>, vector<16x16xf32>
    %c0_1 = arith.constant 0 : index
    %c0_2 = arith.constant 0 : index
    %1 = vector.load %arg2[%c0_1, %c0_2] : memref<16x128xf32, #tpu.memory_space<vmem>>, vector<16x128xf32>
    %c0_3 = arith.constant 0 : index
    %c0_4 = arith.constant 0 : index
    %2 = vector.load %arg3[%c0_3, %c0_4] : memref<1x128xf32, #tpu.memory_space<vmem>>, vector<1x128xf32>
    %cst = arith.constant dense<0.000000e+00> : vector<16x128xf32>
    %3 = tpu.matmul %0, %1, %cst {dimension_numbers = #tpu.dot_dimension_numbers<[1], [0], [0], [1], [0, 0, 1, 1], [], []>} : vector<16x16xf32>, vector<16x128xf32>, vector<16x128xf32> -> vector<16x128xf32>
    %4 = vector.broadcast %2 : vector<1x128xf32> to vector<16x128xf32>
    %5 = arith.addf %3, %4 : vector<16x128xf32>
    %cst_5 = arith.constant 0.000000e+00 : f32
    %6 = vector.broadcast %cst_5 : f32 to vector<16x128xf32>
    %7 = arith.maximumf %5, %6 : vector<16x128xf32>
    %c0_6 = arith.constant 0 : index
    %c0_7 = arith.constant 0 : index
    %8 = vector.load %arg4[%c0_6, %c0_7] : memref<128x128xf32, #tpu.memory_space<vmem>>, vector<128x128xf32>
    %c0_8 = arith.constant 0 : index
    %c0_9 = arith.constant 0 : index
    %9 = vector.load %arg5[%c0_8, %c0_9] : memref<1x128xf32, #tpu.memory_space<vmem>>, vector<1x128xf32>
    %cst_10 = arith.constant dense<0.000000e+00> : vector<16x128xf32>
    %10 = tpu.matmul %7, %8, %cst_10 {dimension_numbers = #tpu.dot_dimension_numbers<[1], [0], [0], [1], [0, 0, 1, 1], [], []>} : vector<16x128xf32>, vector<128x128xf32>, vector<16x128xf32> -> vector<16x128xf32>
    %11 = vector.broadcast %9 : vector<1x128xf32> to vector<16x128xf32>
    %12 = arith.addf %10, %11 : vector<16x128xf32>
    %cst_11 = arith.constant 0.000000e+00 : f32
    %13 = vector.broadcast %cst_11 : f32 to vector<16x128xf32>
    %14 = arith.maximumf %12, %13 : vector<16x128xf32>
    %c0_12 = arith.constant 0 : index
    %c0_13 = arith.constant 0 : index
    %15 = vector.load %arg6[%c0_12, %c0_13] : memref<128x128xf32, #tpu.memory_space<vmem>>, vector<128x128xf32>
    %c0_14 = arith.constant 0 : index
    %c0_15 = arith.constant 0 : index
    %16 = vector.load %arg7[%c0_14, %c0_15] : memref<1x128xf32, #tpu.memory_space<vmem>>, vector<1x128xf32>
    %cst_16 = arith.constant dense<0.000000e+00> : vector<16x128xf32>
    %17 = tpu.matmul %14, %15, %cst_16 {dimension_numbers = #tpu.dot_dimension_numbers<[1], [0], [0], [1], [0, 0, 1, 1], [], []>} : vector<16x128xf32>, vector<128x128xf32>, vector<16x128xf32> -> vector<16x128xf32>
    %18 = vector.broadcast %16 : vector<1x128xf32> to vector<16x128xf32>
    %19 = arith.addf %17, %18 : vector<16x128xf32>
    %c0_17 = arith.constant 0 : index
    %c0_18 = arith.constant 0 : index
    %20 = vector.load %arg8[%c0_17, %c0_18] : memref<16x128xf32, #tpu.memory_space<vmem>>, vector<16x128xf32>
    tpu.vector_store %arg8[%c0_17, %c0_18], %19 {strides = array<i32>} : memref<16x128xf32, #tpu.memory_space<vmem>>, vector<16x128xf32>,
    return
  }
  func.func @transform_0(%arg0: i32) -> (i32, i32) {
    %c0_i32 = arith.constant 0 : i32
    %c0_i32_0 = arith.constant 0 : i32
    return %arg0, %c0_i32 : i32, i32
  }
  func.func @transform_1(%arg0: i32) -> (i32, i32) {
    %c0_i32 = arith.constant 0 : i32
    %c0_i32_0 = arith.constant 0 : i32
    %c0_i32_1 = arith.constant 0 : i32
    return %c0_i32, %c0_i32_0 : i32, i32
  }
  func.func @transform_2(%arg0: i32) -> (i32, i32) {
    %c0_i32 = arith.constant 0 : i32
    %c0_i32_0 = arith.constant 0 : i32
    %c0_i32_1 = arith.constant 0 : i32
    return %c0_i32, %c0_i32_0 : i32, i32
  }
  func.func @transform_3(%arg0: i32) -> (i32, i32) {
    %c0_i32 = arith.constant 0 : i32
    %c0_i32_0 = arith.constant 0 : i32
    %c0_i32_1 = arith.constant 0 : i32
    return %c0_i32, %c0_i32_0 : i32, i32
  }
  func.func @transform_4(%arg0: i32) -> (i32, i32) {
    %c0_i32 = arith.constant 0 : i32
    %c0_i32_0 = arith.constant 0 : i32
    %c0_i32_1 = arith.constant 0 : i32
    return %c0_i32, %c0_i32_0 : i32, i32
  }
  func.func @transform_5(%arg0: i32) -> (i32, i32) {
    %c0_i32 = arith.constant 0 : i32
    %c0_i32_0 = arith.constant 0 : i32
    %c0_i32_1 = arith.constant 0 : i32
    return %c0_i32, %c0_i32_0 : i32, i32
  }
  func.func @transform_6(%arg0: i32) -> (i32, i32) {
    %c0_i32 = arith.constant 0 : i32
    %c0_i32_0 = arith.constant 0 : i32
    %c0_i32_1 = arith.constant 0 : i32
    return %c0_i32, %c0_i32_0 : i32, i32
  }
  func.func @transform_7(%arg0: i32) -> (i32, i32) {
    %c0_i32 = arith.constant 0 : i32
    %c0_i32_0 = arith.constant 0 : i32
    return %arg0, %c0_i32 : i32, i32
  }
}

</mosaic_0001>

<llo_original>
// kernel: tpu_custom_call.1
$region0: #{tpu_custom_call.1}
  #allocation0 [shape = 'u32[]', space=smem, size = 0x4, offset = 0x4, fixed_abs, tag = 'smem constant byte address 0x4 - core index']
  #allocation1 [shape = 'u32[72,128]{1,0:T(1,128)}', space=vmem, size = 0x9000, scoped, tag = 'internal scratch']
  %s0 = inlined_call_operand.hbm [shape: f32[16,16], index: 0, kind: input, shape index: {}]
  %s1 = inlined_call_operand.hbm [shape: f32[16,128], index: 1, kind: input, shape index: {}]
  %s2 = inlined_call_operand.vmem [shape: f32[1,128], index: 2, kind: input, shape index: {}]
  %s3 = inlined_call_operand.hbm [shape: f32[128,128], index: 3, kind: input, shape index: {}]
  %s4 = inlined_call_operand.vmem [shape: f32[1,128], index: 4, kind: input, shape index: {}]
  %s5 = inlined_call_operand.hbm [shape: f32[128,128], index: 5, kind: input, shape index: {}]
  %s6 = inlined_call_operand.vmem [shape: f32[1,128], index: 6, kind: input, shape index: {}]
  %s7 = inlined_call_operand.hbm [shape: f32[16,128], index: 7, kind: output, shape index: {}]
  %s8 = sld [smem:[#allocation0]]
  $region54: #{tpu_custom_call.1} parent=0
    _
  %s10 = ssub.s32 1, %s8
  %s11 = scalar_select 0, %s10, %s8
  $region1: #{tpu_custom_call.1} parent=0
    #allocation2 [shape = 'u8[8192]{0}', space=vmem, size = 0x2000, scoped, tag = 'input window, operand 0, single buffered']
    #allocation3 [shape = 's32[1]{0}', space=sflag, size = 0x4, scoped, tag = 'scoped memory for tpu_custom_call.1']
    #allocation4 [shape = 's32[1]{0}', space=sflag, size = 0x4, scoped, tag = 'scoped memory for tpu_custom_call.1']
    #allocation5 [shape = 'u8[8192]{0}', space=vmem, size = 0x2000, scoped, tag = 'input window, operand 1, single buffered']
    #allocation6 [shape = 's32[1]{0}', space=sflag, size = 0x4, scoped, tag = 'scoped memory for tpu_custom_call.1']
    #allocation7 [shape = 'u8[65536]{0}', space=vmem, size = 0x10000, scoped, tag = 'input window, operand 3, single buffered']
    #allocation8 [shape = 'u8[65536]{0}', space=vmem, size = 0x10000, scoped, tag = 'input window, operand 5, single buffered']
    #allocation9 [shape = 's32[1]{0}', space=sflag, size = 0x4, scoped, tag = 'scoped memory for tpu_custom_call.1']
    #allocation10 [shape = 'u8[8192]{0}', space=vmem, size = 0x2000, scoped, tag = 'output window, operand 0, single buffered']
    %12 = vsyncpa [#allocation3], 0
    %13 = vsyncpa [#allocation6], 0
    %14 = vsyncpa [#allocation9], 0
    %15 = vsyncpa [#allocation4], 0
    // Predicated region
    $region2: #{tpu_custom_call.1} parent=1 // pred_check
      _
    $region3: #{tpu_custom_call.1} parent=1 // pred_check_branch
      %17 = sbr.rel (0) target = $region5
    $region4: #{tpu_custom_call.1} parent=1 // pred_region
      %19 = vsyncadd [#allocation3], 0
      %s20 = sshll.u32 %s0, 4
      %s21 = int_to_ptr.hbm [resolvable:$true] %s20
      %s22 = sshll.u32 [#allocation2], 4
      %s23 = int_to_ptr.vmem [resolvable:$true] %s22
      %28 = dma.hbm_to_vmem [thread:$0]  %s21, 256, %s23, [#allocation3], 128, 128, 8
    $region5: #{tpu_custom_call.1} parent=1 // pred_fallthru
      _
    // Predicated region
    $region6: #{tpu_custom_call.1} parent=1 // pred_check
      _
    $region7: #{tpu_custom_call.1} parent=1 // pred_check_branch
      %30 = sbr.rel (0) target = $region9
    $region8: #{tpu_custom_call.1} parent=1 // pred_region
      %32 = vsyncadd [#allocation6], 0
      %s33 = sshll.u32 %s1, 4
      %s34 = int_to_ptr.hbm [resolvable:$true] %s33
      %s35 = sshll.u32 [#allocation5], 4
      %s36 = int_to_ptr.vmem [resolvable:$true] %s35
      %41 = dma.hbm_to_vmem [thread:$0]  %s34, 256, %s36, [#allocation6], 128, 128, 8
    $region9: #{tpu_custom_call.1} parent=1 // pred_fallthru
      _
    // Predicated region
    $region10: #{tpu_custom_call.1} parent=1 // pred_check
      _
    $region11: #{tpu_custom_call.1} parent=1 // pred_check_branch
      %43 = sbr.rel (0) target = $region13
    $region12: #{tpu_custom_call.1} parent=1 // pred_region
      _
    $region13: #{tpu_custom_call.1} parent=1 // pred_fallthru
      _
    // Predicated region
    $region14: #{tpu_custom_call.1} parent=1 // pred_check
      _
    $region15: #{tpu_custom_call.1} parent=1 // pred_check_branch
      %45 = sbr.rel (0) target = $region17
    $region16: #{tpu_custom_call.1} parent=1 // pred_region
      %47 = vsyncadd [#allocation6], 0
      %s48 = sshll.u32 %s3, 4
      %s49 = int_to_ptr.hbm [resolvable:$true] %s48
      %s50 = sshll.u32 [#allocation7], 4
      %s51 = int_to_ptr.vmem [resolvable:$true] %s50
      %56 = dma.hbm_to_vmem [thread:$0]  %s49, 2048, %s51, [#allocation6], 128, 128, 8
    $region17: #{tpu_custom_call.1} parent=1 // pred_fallthru
      _
    // Predicated region
    $region18: #{tpu_custom_call.1} parent=1 // pred_check
      _
    $region19: #{tpu_custom_call.1} parent=1 // pred_check_branch
      %58 = sbr.rel (0) target = $region21
    $region20: #{tpu_custom_call.1} parent=1 // pred_region
      _
    $region21: #{tpu_custom_call.1} parent=1 // pred_fallthru
      _
    // Predicated region
    $region22: #{tpu_custom_call.1} parent=1 // pred_check
      _
    $region23: #{tpu_custom_call.1} parent=1 // pred_check_branch
      %60 = sbr.rel (0) target = $region25
    $region24: #{tpu_custom_call.1} parent=1 // pred_region
      %62 = vsyncadd [#allocation9], 0
      %s63 = sshll.u32 %s5, 4
      %s64 = int_to_ptr.hbm [resolvable:$true] %s63
      %s65 = sshll.u32 [#allocation8], 4
      %s66 = int_to_ptr.vmem [resolvable:$true] %s65
      %71 = dma.hbm_to_vmem [thread:$0]  %s64, 2048, %s66, [#allocation9], 128, 128, 8
    $region25: #{tpu_custom_call.1} parent=1 // pred_fallthru
      _
    // Predicated region
    $region26: #{tpu_custom_call.1} parent=1 // pred_check
      _
    $region27: #{tpu_custom_call.1} parent=1 // pred_check_branch
      %73 = sbr.rel (0) target = $region29
    $region28: #{tpu_custom_call.1} parent=1 // pred_region
      _
    $region29: #{tpu_custom_call.1} parent=1 // pred_fallthru
      _
    // Predicated region
    $region30: #{tpu_custom_call.1} parent=1 // pred_check
      _
    $region31: #{tpu_custom_call.1} parent=1 // pred_check_branch
      %75 = sbr.rel (0) target = $region33
    $region32: #{tpu_custom_call.1} parent=1 // pred_region
      %77 = dma.done [#allocation3], 256
    $region33: #{tpu_custom_call.1} parent=1 // pred_fallthru
      _
    // Predicated region
    $region34: #{tpu_custom_call.1} parent=1 // pred_check
      _
    $region35: #{tpu_custom_call.1} parent=1 // pred_check_branch
      %79 = sbr.rel (0) target = $region37
    $region36: #{tpu_custom_call.1} parent=1 // pred_region
      %81 = dma.done [#allocation6], 256
    $region37: #{tpu_custom_call.1} parent=1 // pred_fallthru
      _
    // Predicated region
    $region38: #{tpu_custom_call.1} parent=1 // pred_check
      _
    $region39: #{tpu_custom_call.1} parent=1 // pred_check_branch
      %83 = sbr.rel (0) target = $region41
    $region40: #{tpu_custom_call.1} parent=1 // pred_region
      %85 = dma.done [#allocation6], 2048
    $region41: #{tpu_custom_call.1} parent=1 // pred_fallthru
      _
    // Predicated region
    $region42: #{tpu_custom_call.1} parent=1 // pred_check
      _
    $region43: #{tpu_custom_call.1} parent=1 // pred_check_branch
      %87 = sbr.rel (0) target = $region45
    $region44: #{tpu_custom_call.1} parent=1 // pred_region
      %89 = dma.done [#allocation9], 2048
    $region45: #{tpu_custom_call.1} parent=1 // pred_fallthru
      _
    %v90 = vld [vmem:[#allocation2] sm:$0xff]
    %v91 = vld [vmem:[#allocation2 + $0x8] sm:$0xff]
    %v92 = vld [vmem:[#allocation5] sm:$0xff]
    %v93 = vld [vmem:[#allocation5 + $0x8] sm:$0xff]
    %v94 = vld [vmem:[%s2] sm:$0x1]
    %v96 = vperm.slane %v94, 0
    %vm98 = vcmask 130048
    %v100 = vsel %vm98, %v90, 0
    %v103 = vsel %vm98, %v91, 0
    %105 = vmatpush.msra.mxu0 0.0
    %106 = vmatpush.msra.mxu0 0.0
    %107 = vmatpush.msra.mxu0 0.0
    %108 = vmatpush.msra.mxu0 0.0
    %109 = vmatpush.msra.mxu0 0.0
    %110 = vmatpush.msra.mxu0 0.0
    %111 = vmatpush.msra.mxu0 0.0
    %112 = vmatpush.msra.mxu0 0.0
    %113 = vmatpush.msra.mxu0 0.0
    %114 = vmatpush.msra.mxu0 0.0
    %115 = vmatpush.msra.mxu0 0.0
    %116 = vmatpush.msra.mxu0 0.0
    %117 = vmatpush.msra.mxu0 0.0
    %118 = vmatpush.msra.mxu0 0.0
    %119 = vmatpush.msra.mxu0 %v93
    %120 = vmatpush.msra.mxu0 %v92
    %121 = vmatmul.f32.gmra.mxu0 %v100
    %v122 = vpop.f32.mrf.mxu0
    %v123 = vadd.f32 %v96, %v122
    %124 = vmatmul.f32.gmra.mxu0 %v103
    %v125 = vpop.f32.mrf.mxu0
    %v126 = vadd.f32 %v96, %v125
    %127 = vdwg.mxu0
    %v128 = vmax.f32 %v123, 0.0
    %v129 = vmax.f32 %v126, 0.0
    %v130 = vld [vmem:[#allocation7] sm:$0xff]
    %v131 = vld [vmem:[#allocation7 + $0x8] sm:$0xff]
    %v132 = vld [vmem:[#allocation7 + $0x10] sm:$0xff]
    %v133 = vld [vmem:[#allocation7 + $0x18] sm:$0xff]
    %v134 = vld [vmem:[#allocation7 + $0x20] sm:$0xff]
    %v135 = vld [vmem:[#allocation7 + $0x28] sm:$0xff]
    %v136 = vld [vmem:[#allocation7 + $0x30] sm:$0xff]
    %v137 = vld [vmem:[#allocation7 + $0x38] sm:$0xff]
    %v138 = vld [vmem:[#allocation7 + $0x40] sm:$0xff]
    %v139 = vld [vmem:[#allocation7 + $0x48] sm:$0xff]
    %v140 = vld [vmem:[#allocation7 + $0x50] sm:$0xff]
    %v141 = vld [vmem:[#allocation7 + $0x58] sm:$0xff]
    %v142 = vld [vmem:[#allocation7 + $0x60] sm:$0xff]
    %v143 = vld [vmem:[#allocation7 + $0x68] sm:$0xff]
    %v144 = vld [vmem:[#allocation7 + $0x70] sm:$0xff]
    %v145 = vld [vmem:[#allocation7 + $0x78] sm:$0xff]
    %v146 = vld [vmem:[%s4] sm:$0x1]
    %v148 = vperm.slane %v146, 0
    %150 = vmatpush.msra.mxu0 %v145
    %151 = vmatpush.msra.mxu0 %v144
    %152 = vmatpush.msra.mxu0 %v143
    %153 = vmatpush.msra.mxu0 %v142
    %154 = vmatpush.msra.mxu0 %v141
    %155 = vmatpush.msra.mxu0 %v140
    %156 = vmatpush.msra.mxu0 %v139
    %157 = vmatpush.msra.mxu0 %v138
    %158 = vmatpush.msra.mxu0 %v137
    %159 = vmatpush.msra.mxu0 %v136
    %160 = vmatpush.msra.mxu0 %v135
    %161 = vmatpush.msra.mxu0 %v134
    %162 = vmatpush.msra.mxu0 %v133
    %163 = vmatpush.msra.mxu0 %v132
    %164 = vmatpush.msra.mxu0 %v131
    %165 = vmatpush.msra.mxu0 %v130
    %166 = vmatmul.f32.gmra.mxu0 %v128
    %v167 = vpop.f32.mrf.mxu0
    %v168 = vadd.f32 %v148, %v167
    %169 = vmatmul.f32.gmra.mxu0 %v129
    %v170 = vpop.f32.mrf.mxu0
    %v171 = vadd.f32 %v148, %v170
    %172 = vdwg.mxu0
    %v173 = vmax.f32 %v168, 0.0
    %v174 = vmax.f32 %v171, 0.0
    %v175 = vld [vmem:[#allocation8] sm:$0xff]
    %v176 = vld [vmem:[#allocation8 + $0x8] sm:$0xff]
    %v177 = vld [vmem:[#allocation8 + $0x10] sm:$0xff]
    %v178 = vld [vmem:[#allocation8 + $0x18] sm:$0xff]
    %v179 = vld [vmem:[#allocation8 + $0x20] sm:$0xff]
    %v180 = vld [vmem:[#allocation8 + $0x28] sm:$0xff]
    %v181 = vld [vmem:[#allocation8 + $0x30] sm:$0xff]
    %v182 = vld [vmem:[#allocation8 + $0x38] sm:$0xff]
    %v183 = vld [vmem:[#allocation8 + $0x40] sm:$0xff]
    %v184 = vld [vmem:[#allocation8 + $0x48] sm:$0xff]
    %v185 = vld [vmem:[#allocation8 + $0x50] sm:$0xff]
    %v186 = vld [vmem:[#allocation8 + $0x58] sm:$0xff]
    %v187 = vld [vmem:[#allocation8 + $0x60] sm:$0xff]
    %v188 = vld [vmem:[#allocation8 + $0x68] sm:$0xff]
    %v189 = vld [vmem:[#allocation8 + $0x70] sm:$0xff]
    %v190 = vld [vmem:[#allocation8 + $0x78] sm:$0xff]
    %v191 = vld [vmem:[%s6] sm:$0x1]
    %v193 = vperm.slane %v191, 0
    %195 = vmatpush.msra.mxu0 %v190
    %196 = vmatpush.msra.mxu0 %v189
    %197 = vmatpush.msra.mxu0 %v188
    %198 = vmatpush.msra.mxu0 %v187
    %199 = vmatpush.msra.mxu0 %v186
    %200 = vmatpush.msra.mxu0 %v185
    %201 = vmatpush.msra.mxu0 %v184
    %202 = vmatpush.msra.mxu0 %v183
    %203 = vmatpush.msra.mxu0 %v182
    %204 = vmatpush.msra.mxu0 %v181
    %205 = vmatpush.msra.mxu0 %v180
    %206 = vmatpush.msra.mxu0 %v179
    %207 = vmatpush.msra.mxu0 %v178
    %208 = vmatpush.msra.mxu0 %v177
    %209 = vmatpush.msra.mxu0 %v176
    %210 = vmatpush.msra.mxu0 %v175
    %211 = vmatmul.f32.gmra.mxu0 %v173
    %v212 = vpop.f32.mrf.mxu0
    %v213 = vadd.f32 %v193, %v212
    %214 = vmatmul.f32.gmra.mxu0 %v174
    %v215 = vpop.f32.mrf.mxu0
    %v216 = vadd.f32 %v193, %v215
    %217 = vdwg.mxu0
    %218 = vst [vmem:[#allocation10] sm:$0xff] %v213
    %219 = vst [vmem:[#allocation10 + $0x8] sm:$0xff] %v216
    // Predicated region
    $region46: #{tpu_custom_call.1} parent=1 // pred_check
      _
    $region47: #{tpu_custom_call.1} parent=1 // pred_check_branch
      %221 = sbr.rel (0) target = $region49
    $region48: #{tpu_custom_call.1} parent=1 // pred_region
      %223 = vsyncadd [#allocation4], 0
      %s224 = sshll.u32 [#allocation10], 4
      %s225 = int_to_ptr.vmem [resolvable:$true] %s224
      %s226 = sshll.u32 %s7, 4
      %s227 = int_to_ptr.hbm [resolvable:$true] %s226
      %232 = dma.vmem_to_hbm [thread:$0]  %s225, 256, %s227, [#allocation4], 128, 128, 8
    $region49: #{tpu_custom_call.1} parent=1 // pred_fallthru
      _
    // Predicated region
    $region50: #{tpu_custom_call.1} parent=1 // pred_check
      _
    $region51: #{tpu_custom_call.1} parent=1 // pred_check_branch
      %234 = sbr.rel (0) target = $region53
    $region52: #{tpu_custom_call.1} parent=1 // pred_region
      %236 = dma.done [#allocation4], 256
    $region53: #{tpu_custom_call.1} parent=1 // pred_fallthru
      _
    %237 = vsyncpa [#allocation3], 1
    %238 = vsyncpa [#allocation6], 1
    %239 = vsyncpa [#allocation9], 1
    %240 = vsyncpa [#allocation4], 1

</llo_original>
